<compile_context>
chip_gen: v5e
topology: v5e:2x2
jax: 0.10.0
libtpu: 0.0.40
codegen_flags: <defaults>
</compile_context>

<pallas_src>
import functools

import jax
import jax.numpy as jnp
from jax.experimental import pallas as pl
from jax.experimental.pallas import tpu as pltpu


def _round_up(v, m):
    return (v + m - 1) // m * m


def _double_conv_kernel(x_ref, w1_ref, b1_ref, w2_ref, b2_ref, m_ref,
                        o_ref, patches_ref, *, W, HW, cblk, cin, cmid, zero_scratch):
    """Fused Conv3x3+ReLU -> Conv3x3+ReLU for one image (channel-major, spatial on lanes)."""
    if zero_scratch:
        # Channel-padding rows (c < cblk) are contracted against zero weight columns,
        # but stale VMEM could hold NaN bit patterns and 0 * NaN = NaN.  One memset
        # at the start covers both convs (padding rows are never overwritten).
        patches_ref[...] = jnp.zeros_like(patches_ref)

    def conv3x3_relu(x, w, b, c):
        # Build the 3x3 'same' im2col matrix: tap k occupies rows [k*cblk, k*cblk + c).
        # Each tap is a lane rotation (XLU) of x, zeroed on the padding halo via the
        # precomputed per-tap mask, then stored full-width (lane-dense, unmasked vst).
        k = 0
        for ky in (-1, 0, 1):
            for kx in (-1, 0, 1):
                s = ky * W + kx                              # flat shift of this tap
                if s == 0:
                    slab = x                                 # centre tap: no shift, no halo
                else:
                    slab = pltpu.roll(x, shift=(-s) % HW, axis=1) * m_ref[k:k + 1, :]
                patches_ref[k * cblk:k * cblk + c, :] = slab
                k += 1
        acc = jnp.dot(w, patches_ref[...], preferred_element_type=jnp.float32)
        return jnp.maximum(acc + b, 0.0)

    x = x_ref[0].astype(jnp.float32)                         # (Cin,  H*W)
    h = conv3x3_relu(x, w1_ref[...], b1_ref[...], cin)       # (Cmid, H*W)
    y = conv3x3_relu(h, w2_ref[...], b2_ref[...], cmid)      # (Cout, H*W)
    o_ref[0] = y.astype(o_ref.dtype)


def _pack_weight(w_hwio, cblk):
    """(3,3,Cin,Cout) HWIO -> (Cout, 9*cblk), matching the im2col row layout."""
    kh, kw, cin, cout = w_hwio.shape
    w = jnp.transpose(w_hwio, (3, 0, 1, 2))                     # (Cout, 3, 3, Cin)
    w = jnp.pad(w, ((0, 0), (0, 0), (0, 0), (0, cblk - cin)))   # pad per-tap channel block
    return w.reshape(cout, kh * kw * cblk).astype(jnp.float32)


def _tap_masks(H, W):
    """(9, H*W) 0/1 masks: 1 where the (ky, kx)-shifted source pixel is inside the image."""
    HW = H * W
    row = jnp.arange(HW, dtype=jnp.int32) // W
    col = jnp.arange(HW, dtype=jnp.int32) % W
    masks = []
    for ky in (-1, 0, 1):
        for kx in (-1, 0, 1):
            ok = ((row + ky >= 0) & (row + ky < H) &
                  (col + kx >= 0) & (col + kx < W))
            masks.append(ok.astype(jnp.float32))
    return jnp.stack(masks, axis=0)


def double_conv(x_nchw, params):
    """DoubleConv forward. Input/output layout: NCHW (PyTorch convention)."""
    w1, b1, w2, b2 = params
    N, Cin, H, W = x_nchw.shape
    Cmid = w1.shape[-1]
    Cout = w2.shape[-1]
    HW = H * W
    cblk = _round_up(max(Cin, Cmid), 8)

    # Metadata-only reshape: stays channel-major, spatial flattened onto lanes.
    x_flat = x_nchw.reshape(N, Cin, HW)

    # Tiny host-side constants (packed weights, biases, halo masks); no activation passes.
    w1p = _pack_weight(w1, cblk)                       # (Cmid, 9*cblk)
    w2p = _pack_weight(w2, cblk)                       # (Cout, 9*cblk)
    b1c = b1.reshape(Cmid, 1).astype(jnp.float32)
    b2c = b2.reshape(Cout, 1).astype(jnp.float32)
    mask9 = _tap_masks(H, W)                           # (9, HW)

    kernel = functools.partial(
        _double_conv_kernel, W=W, HW=HW, cblk=cblk, cin=Cin, cmid=Cmid,
        zero_scratch=(Cin < cblk) or (Cmid < cblk))

    out_flat = pl.pallas_call(
        kernel,
        out_shape=jax.ShapeDtypeStruct((N, Cout, HW), x_nchw.dtype),
        grid=(N,),
        in_specs=[
            pl.BlockSpec((1, Cin, HW), lambda n: (n, 0, 0)),
            pl.BlockSpec((Cmid, 9 * cblk), lambda n: (0, 0)),
            pl.BlockSpec((Cmid, 1), lambda n: (0, 0)),
            pl.BlockSpec((Cout, 9 * cblk), lambda n: (0, 0)),
            pl.BlockSpec((Cout, 1), lambda n: (0, 0)),
            pl.BlockSpec((9, HW), lambda n: (0, 0)),
        ],
        out_specs=pl.BlockSpec((1, Cout, HW), lambda n: (n, 0, 0)),
        scratch_shapes=[pltpu.VMEM((9 * cblk, HW), jnp.float32)],   # shared im2col buffer
        compiler_params=pltpu.CompilerParams(dimension_semantics=("parallel",)),
    )(x_flat, w1p, b1c, w2p, b2c, mask9)

    return out_flat.reshape(N, Cout, H, W)


def init_params(key, in_channels, out_channels):
    """Deterministic synthetic parameter init (shapes match nn.Conv2d(.,.,3,padding=1))."""
    k1, k2, k3, k4 = jax.random.split(key, 4)
    fan1 = in_channels * 9
    fan2 = out_channels * 9
    w1 = jax.random.uniform(k1, (3, 3, in_channels, out_channels),
                            jnp.float32, -1.0, 1.0) / jnp.sqrt(fan1)
    b1 = jax.random.uniform(k2, (out_channels,), jnp.float32, -1.0, 1.0) / jnp.sqrt(fan1)
    w2 = jax.random.uniform(k3, (3, 3, out_channels, out_channels),
                            jnp.float32, -1.0, 1.0) / jnp.sqrt(fan2)
    b2 = jax.random.uniform(k4, (out_channels,), jnp.float32, -1.0, 1.0) / jnp.sqrt(fan2)
    return w1, b1, w2, b2


def _reference_double_conv(x_nchw, params):
    """Pure-JAX reference (lax conv) for correctness checking."""
    w1, b1, w2, b2 = params
    dn = jax.lax.conv_dimension_numbers(x_nchw.shape, w1.shape, ("NCHW", "HWIO", "NCHW"))
    h = jax.lax.conv_general_dilated(x_nchw, w1, (1, 1), "SAME", dimension_numbers=dn)
    h = jax.nn.relu(h + b1[None, :, None, None])
    y = jax.lax.conv_general_dilated(h, w2, (1, 1), "SAME", dimension_numbers=dn)
    return jax.nn.relu(y + b2[None, :, None, None])


if __name__ == "__main__":
    key = jax.random.PRNGKey(0)
    kx, kp = jax.random.split(key)

    N, Cin, Cout, H, W = 2, 4, 8, 16, 16
    x = jax.random.normal(kx, (N, Cin, H, W), jnp.float32)   # NCHW, like PyTorch
    params = init_params(kp, Cin, Cout)

    out = jax.block_until_ready(double_conv(x, params))
    ref = _reference_double_conv(x, params)

    assert out.shape == (N, Cout, H, W)
    assert jnp.allclose(out, ref, atol=1e-4, rtol=1e-4), "Pallas result mismatches reference"

    print("KERNEL_OK")
</pallas_src>

<mosaic_0001>
module attributes {stable_mosaic.version = 11 : i64} {
  func.func @_double_conv_kernel(%arg0: i32, %arg1: memref<1x4x256xf32, #tpu.memory_space<vmem>>, %arg2: memref<8x72xf32, #tpu.memory_space<vmem>>, %arg3: memref<8x1xf32, #tpu.memory_space<vmem>>, %arg4: memref<8x72xf32, #tpu.memory_space<vmem>>, %arg5: memref<8x1xf32, #tpu.memory_space<vmem>>, %arg6: memref<9x256xf32, #tpu.memory_space<vmem>>, %arg7: memref<1x8x256xf32, #tpu.memory_space<vmem>>, %arg8: memref<72x256xf32, #tpu.memory_space<vmem>>) attributes {dimension_semantics = [#tpu.dimension_semantics<parallel>], iteration_bounds = array<i64: 2>, scalar_prefetch = 0 : i64, scratch_operands = 1 : i64, tpu.core_type = #tpu.core_type<tc>, window_params = [{transform_indices = @transform_0, window_bounds = array<i64: 1, 4, 256>}, {pipeline_mode = #tpu.pipeline_mode<synchronous>, transform_indices = @transform_1, window_bounds = array<i64: 8, 72>}, {pipeline_mode = #tpu.pipeline_mode<synchronous>, transform_indices = @transform_2, window_bounds = array<i64: 8, 1>}, {pipeline_mode = #tpu.pipeline_mode<synchronous>, transform_indices = @transform_3, window_bounds = array<i64: 8, 72>}, {pipeline_mode = #tpu.pipeline_mode<synchronous>, transform_indices = @transform_4, window_bounds = array<i64: 8, 1>}, {pipeline_mode = #tpu.pipeline_mode<synchronous>, transform_indices = @transform_5, window_bounds = array<i64: 9, 256>}, {transform_indices = @transform_6, window_bounds = array<i64: 1, 8, 256>}]} {
    %cst = arith.constant 0.000000e+00 : f32
    %0 = vector.broadcast %cst : f32 to vector<72x256xf32>
    %c0 = arith.constant 0 : index
    %c0_0 = arith.constant 0 : index
    %1 = vector.load %arg8[%c0, %c0_0] : memref<72x256xf32, #tpu.memory_space<vmem>>, vector<72x256xf32>
    tpu.vector_store %arg8[%c0, %c0_0], %0 {strides = array<i32>} : memref<72x256xf32, #tpu.memory_space<vmem>>, vector<72x256xf32>,
    %c0_1 = arith.constant 0 : index
    %c0_2 = arith.constant 0 : index
    %c0_3 = arith.constant 0 : index
    %2 = vector.load %arg1[%c0_1, %c0_2, %c0_3] : memref<1x4x256xf32, #tpu.memory_space<vmem>>, vector<1x4x256xf32>
    %3 = vector.shape_cast %2 : vector<1x4x256xf32> to vector<4x256xf32>
    %c0_4 = arith.constant 0 : index
    %c0_5 = arith.constant 0 : index
    %4 = vector.load %arg2[%c0_4, %c0_5] : memref<8x72xf32, #tpu.memory_space<vmem>>, vector<8x72xf32>
    %c0_6 = arith.constant 0 : index
    %c0_7 = arith.constant 0 : index
    %5 = vector.load %arg3[%c0_6, %c0_7] : memref<8x1xf32, #tpu.memory_space<vmem>>, vector<8x1xf32>
    %c17_i32 = arith.constant 17 : i32
    %6 = tpu.dynamic_rotate %3 by %c17_i32 dim 1 : vector<4x256xf32>, i32 -> vector<4x256xf32>
    %c0_8 = arith.constant 0 : index
    %c0_9 = arith.constant 0 : index
    %7 = vector.load %arg6[%c0_8, %c0_9] : memref<9x256xf32, #tpu.memory_space<vmem>>, vector<1x256xf32>
    %8 = vector.broadcast %7 : vector<1x256xf32> to vector<4x256xf32>
    %9 = arith.mulf %6, %8 : vector<4x256xf32>
    %c0_10 = arith.constant 0 : index
    %c0_11 = arith.constant 0 : index
    %10 = vector.load %arg8[%c0_10, %c0_11] : memref<72x256xf32, #tpu.memory_space<vmem>>, vector<4x256xf32>
    tpu.vector_store %arg8[%c0_10, %c0_11], %9 {strides = array<i32>} : memref<72x256xf32, #tpu.memory_space<vmem>>, vector<4x256xf32>,
    %c16_i32 = arith.constant 16 : i32
    %11 = tpu.dynamic_rotate %3 by %c16_i32 dim 1 : vector<4x256xf32>, i32 -> vector<4x256xf32>
    %c1 = arith.constant 1 : index
    %c0_12 = arith.constant 0 : index
    %12 = vector.load %arg6[%c1, %c0_12] : memref<9x256xf32, #tpu.memory_space<vmem>>, vector<1x256xf32>
    %13 = vector.broadcast %12 : vector<1x256xf32> to vector<4x256xf32>
    %14 = arith.mulf %11, %13 : vector<4x256xf32>
    %c8 = arith.constant 8 : index
    %c0_13 = arith.constant 0 : index
    %15 = vector.load %arg8[%c8, %c0_13] : memref<72x256xf32, #tpu.memory_space<vmem>>, vector<4x256xf32>
    tpu.vector_store %arg8[%c8, %c0_13], %14 {strides = array<i32>} : memref<72x256xf32, #tpu.memory_space<vmem>>, vector<4x256xf32>,
    %c15_i32 = arith.constant 15 : i32
    %16 = tpu.dynamic_rotate %3 by %c15_i32 dim 1 : vector<4x256xf32>, i32 -> vector<4x256xf32>
    %c2 = arith.constant 2 : index
    %c0_14 = arith.constant 0 : index
    %17 = vector.load %arg6[%c2, %c0_14] : memref<9x256xf32, #tpu.memory_space<vmem>>, vector<1x256xf32>
    %18 = vector.broadcast %17 : vector<1x256xf32> to vector<4x256xf32>
    %19 = arith.mulf %16, %18 : vector<4x256xf32>
    %c16 = arith.constant 16 : index
    %c0_15 = arith.constant 0 : index
    %20 = vector.load %arg8[%c16, %c0_15] : memref<72x256xf32, #tpu.memory_space<vmem>>, vector<4x256xf32>
    tpu.vector_store %arg8[%c16, %c0_15], %19 {strides = array<i32>} : memref<72x256xf32, #tpu.memory_space<vmem>>, vector<4x256xf32>,
    %c1_i32 = arith.constant 1 : i32
    %21 = tpu.dynamic_rotate %3 by %c1_i32 dim 1 : vector<4x256xf32>, i32 -> vector<4x256xf32>
    %c3 = arith.constant 3 : index
    %c0_16 = arith.constant 0 : index
    %22 = vector.load %arg6[%c3, %c0_16] : memref<9x256xf32, #tpu.memory_space<vmem>>, vector<1x256xf32>
    %23 = vector.broadcast %22 : vector<1x256xf32> to vector<4x256xf32>
    %24 = arith.mulf %21, %23 : vector<4x256xf32>
    %c24 = arith.constant 24 : index
    %c0_17 = arith.constant 0 : index
    %25 = vector.load %arg8[%c24, %c0_17] : memref<72x256xf32, #tpu.memory_space<vmem>>, vector<4x256xf32>
    tpu.vector_store %arg8[%c24, %c0_17], %24 {strides = array<i32>} : memref<72x256xf32, #tpu.memory_space<vmem>>, vector<4x256xf32>,
    %c32 = arith.constant 32 : index
    %c0_18 = arith.constant 0 : index
    %26 = vector.load %arg8[%c32, %c0_18] : memref<72x256xf32, #tpu.memory_space<vmem>>, vector<4x256xf32>
    tpu.vector_store %arg8[%c32, %c0_18], %3 {strides = array<i32>} : memref<72x256xf32, #tpu.memory_space<vmem>>, vector<4x256xf32>,
    %c255_i32 = arith.constant 255 : i32
    %27 = tpu.dynamic_rotate %3 by %c255_i32 dim 1 : vector<4x256xf32>, i32 -> vector<4x256xf32>
    %c5 = arith.constant 5 : index
    %c0_19 = arith.constant 0 : index
    %28 = vector.load %arg6[%c5, %c0_19] : memref<9x256xf32, #tpu.memory_space<vmem>>, vector<1x256xf32>
    %29 = vector.broadcast %28 : vector<1x256xf32> to vector<4x256xf32>
    %30 = arith.mulf %27, %29 : vector<4x256xf32>
    %c40 = arith.constant 40 : index
    %c0_20 = arith.constant 0 : index
    %31 = vector.load %arg8[%c40, %c0_20] : memref<72x256xf32, #tpu.memory_space<vmem>>, vector<4x256xf32>
    tpu.vector_store %arg8[%c40, %c0_20], %30 {strides = array<i32>} : memref<72x256xf32, #tpu.memory_space<vmem>>, vector<4x256xf32>,
    %c241_i32 = arith.constant 241 : i32
    %32 = tpu.dynamic_rotate %3 by %c241_i32 dim 1 : vector<4x256xf32>, i32 -> vector<4x256xf32>
    %c6 = arith.constant 6 : index
    %c0_21 = arith.constant 0 : index
    %33 = vector.load %arg6[%c6, %c0_21] : memref<9x256xf32, #tpu.memory_space<vmem>>, vector<1x256xf32>
    %34 = vector.broadcast %33 : vector<1x256xf32> to vector<4x256xf32>
    %35 = arith.mulf %32, %34 : vector<4x256xf32>
    %c48 = arith.constant 48 : index
    %c0_22 = arith.constant 0 : index
    %36 = vector.load %arg8[%c48, %c0_22] : memref<72x256xf32, #tpu.memory_space<vmem>>, vector<4x256xf32>
    tpu.vector_store %arg8[%c48, %c0_22], %35 {strides = array<i32>} : memref<72x256xf32, #tpu.memory_space<vmem>>, vector<4x256xf32>,
    %c240_i32 = arith.constant 240 : i32
    %37 = tpu.dynamic_rotate %3 by %c240_i32 dim 1 : vector<4x256xf32>, i32 -> vector<4x256xf32>
    %c7 = arith.constant 7 : index
    %c0_23 = arith.constant 0 : index
    %38 = vector.load %arg6[%c7, %c0_23] : memref<9x256xf32, #tpu.memory_space<vmem>>, vector<1x256xf32>
    %39 = vector.broadcast %38 : vector<1x256xf32> to vector<4x256xf32>
    %40 = arith.mulf %37, %39 : vector<4x256xf32>
    %c56 = arith.constant 56 : index
    %c0_24 = arith.constant 0 : index
    %41 = vector.load %arg8[%c56, %c0_24] : memref<72x256xf32, #tpu.memory_space<vmem>>, vector<4x256xf32>
    tpu.vector_store %arg8[%c56, %c0_24], %40 {strides = array<i32>} : memref<72x256xf32, #tpu.memory_space<vmem>>, vector<4x256xf32>,
    %c239_i32 = arith.constant 239 : i32
    %42 = tpu.dynamic_rotate %3 by %c239_i32 dim 1 : vector<4x256xf32>, i32 -> vector<4x256xf32>
    %c8_25 = arith.constant 8 : index
    %c0_26 = arith.constant 0 : index
    %43 = vector.load %arg6[%c8_25, %c0_26] : memref<9x256xf32, #tpu.memory_space<vmem>>, vector<1x256xf32>
    %44 = vector.broadcast %43 : vector<1x256xf32> to vector<4x256xf32>
    %45 = arith.mulf %42, %44 : vector<4x256xf32>
    %c64 = arith.constant 64 : index
    %c0_27 = arith.constant 0 : index
    %46 = vector.load %arg8[%c64, %c0_27] : memref<72x256xf32, #tpu.memory_space<vmem>>, vector<4x256xf32>
    tpu.vector_store %arg8[%c64, %c0_27], %45 {strides = array<i32>} : memref<72x256xf32, #tpu.memory_space<vmem>>, vector<4x256xf32>,
    %c0_28 = arith.constant 0 : index
    %c0_29 = arith.constant 0 : index
    %47 = vector.load %arg8[%c0_28, %c0_29] : memref<72x256xf32, #tpu.memory_space<vmem>>, vector<72x256xf32>
    %cst_30 = arith.constant dense<0.000000e+00> : vector<8x256xf32>
    %48 = tpu.matmul %4, %47, %cst_30 {dimension_numbers = #tpu.dot_dimension_numbers<[1], [0], [0], [1], [0, 0, 1, 1], [], []>} : vector<8x72xf32>, vector<72x256xf32>, vector<8x256xf32> -> vector<8x256xf32>
    %49 = vector.broadcast %5 : vector<8x1xf32> to vector<8x256xf32>
    %50 = arith.addf %48, %49 : vector<8x256xf32>
    %cst_31 = arith.constant 0.000000e+00 : f32
    %51 = vector.broadcast %cst_31 : f32 to vector<8x256xf32>
    %52 = arith.maximumf %50, %51 : vector<8x256xf32>
    %c0_32 = arith.constant 0 : index
    %c0_33 = arith.constant 0 : index
    %53 = vector.load %arg4[%c0_32, %c0_33] : memref<8x72xf32, #tpu.memory_space<vmem>>, vector<8x72xf32>
    %c0_34 = arith.constant 0 : index
    %c0_35 = arith.constant 0 : index
    %54 = vector.load %arg5[%c0_34, %c0_35] : memref<8x1xf32, #tpu.memory_space<vmem>>, vector<8x1xf32>
    %c17_i32_36 = arith.constant 17 : i32
    %55 = tpu.dynamic_rotate %52 by %c17_i32_36 dim 1 : vector<8x256xf32>, i32 -> vector<8x256xf32>
    %c0_37 = arith.constant 0 : index
    %c0_38 = arith.constant 0 : index
    %56 = vector.load %arg6[%c0_37, %c0_38] : memref<9x256xf32, #tpu.memory_space<vmem>>, vector<1x256xf32>
    %57 = vector.broadcast %56 : vector<1x256xf32> to vector<8x256xf32>
    %58 = arith.mulf %55, %57 : vector<8x256xf32>
    %c0_39 = arith.constant 0 : index
    %c0_40 = arith.constant 0 : index
    %59 = vector.load %arg8[%c0_39, %c0_40] : memref<72x256xf32, #tpu.memory_space<vmem>>, vector<8x256xf32>
    tpu.vector_store %arg8[%c0_39, %c0_40], %58 {strides = array<i32>} : memref<72x256xf32, #tpu.memory_space<vmem>>, vector<8x256xf32>,
    %c16_i32_41 = arith.constant 16 : i32
    %60 = tpu.dynamic_rotate %52 by %c16_i32_41 dim 1 : vector<8x256xf32>, i32 -> vector<8x256xf32>
    %c1_42 = arith.constant 1 : index
    %c0_43 = arith.constant 0 : index
    %61 = vector.load %arg6[%c1_42, %c0_43] : memref<9x256xf32, #tpu.memory_space<vmem>>, vector<1x256xf32>
    %62 = vector.broadcast %61 : vector<1x256xf32> to vector<8x256xf32>
    %63 = arith.mulf %60, %62 : vector<8x256xf32>
    %c8_44 = arith.constant 8 : index
    %c0_45 = arith.constant 0 : index
    %64 = vector.load %arg8[%c8_44, %c0_45] : memref<72x256xf32, #tpu.memory_space<vmem>>, vector<8x256xf32>
    tpu.vector_store %arg8[%c8_44, %c0_45], %63 {strides = array<i32>} : memref<72x256xf32, #tpu.memory_space<vmem>>, vector<8x256xf32>,
    %c15_i32_46 = arith.constant 15 : i32
    %65 = tpu.dynamic_rotate %52 by %c15_i32_46 dim 1 : vector<8x256xf32>, i32 -> vector<8x256xf32>
    %c2_47 = arith.constant 2 : index
    %c0_48 = arith.constant 0 : index
    %66 = vector.load %arg6[%c2_47, %c0_48] : memref<9x256xf32, #tpu.memory_space<vmem>>, vector<1x256xf32>
    %67 = vector.broadcast %66 : vector<1x256xf32> to vector<8x256xf32>
    %68 = arith.mulf %65, %67 : vector<8x256xf32>
    %c16_49 = arith.constant 16 : index
    %c0_50 = arith.constant 0 : index
    %69 = vector.load %arg8[%c16_49, %c0_50] : memref<72x256xf32, #tpu.memory_space<vmem>>, vector<8x256xf32>
    tpu.vector_store %arg8[%c16_49, %c0_50], %68 {strides = array<i32>} : memref<72x256xf32, #tpu.memory_space<vmem>>, vector<8x256xf32>,
    %c1_i32_51 = arith.constant 1 : i32
    %70 = tpu.dynamic_rotate %52 by %c1_i32_51 dim 1 : vector<8x256xf32>, i32 -> vector<8x256xf32>
    %c3_52 = arith.constant 3 : index
    %c0_53 = arith.constant 0 : index
    %71 = vector.load %arg6[%c3_52, %c0_53] : memref<9x256xf32, #tpu.memory_space<vmem>>, vector<1x256xf32>
    %72 = vector.broadcast %71 : vector<1x256xf32> to vector<8x256xf32>
    %73 = arith.mulf %70, %72 : vector<8x256xf32>
    %c24_54 = arith.constant 24 : index
    %c0_55 = arith.constant 0 : index
    %74 = vector.load %arg8[%c24_54, %c0_55] : memref<72x256xf32, #tpu.memory_space<vmem>>, vector<8x256xf32>
    tpu.vector_store %arg8[%c24_54, %c0_55], %73 {strides = array<i32>} : memref<72x256xf32, #tpu.memory_space<vmem>>, vector<8x256xf32>,
    %c32_56 = arith.constant 32 : index
    %c0_57 = arith.constant 0 : index
    %75 = vector.load %arg8[%c32_56, %c0_57] : memref<72x256xf32, #tpu.memory_space<vmem>>, vector<8x256xf32>
    tpu.vector_store %arg8[%c32_56, %c0_57], %52 {strides = array<i32>} : memref<72x256xf32, #tpu.memory_space<vmem>>, vector<8x256xf32>,
    %c255_i32_58 = arith.constant 255 : i32
    %76 = tpu.dynamic_rotate %52 by %c255_i32_58 dim 1 : vector<8x256xf32>, i32 -> vector<8x256xf32>
    %c5_59 = arith.constant 5 : index
    %c0_60 = arith.constant 0 : index
    %77 = vector.load %arg6[%c5_59, %c0_60] : memref<9x256xf32, #tpu.memory_space<vmem>>, vector<1x256xf32>
    %78 = vector.broadcast %77 : vector<1x256xf32> to vector<8x256xf32>
    %79 = arith.mulf %76, %78 : vector<8x256xf32>
    %c40_61 = arith.constant 40 : index
    %c0_62 = arith.constant 0 : index
    %80 = vector.load %arg8[%c40_61, %c0_62] : memref<72x256xf32, #tpu.memory_space<vmem>>, vector<8x256xf32>
    tpu.vector_store %arg8[%c40_61, %c0_62], %79 {strides = array<i32>} : memref<72x256xf32, #tpu.memory_space<vmem>>, vector<8x256xf32>,
    %c241_i32_63 = arith.constant 241 : i32
    %81 = tpu.dynamic_rotate %52 by %c241_i32_63 dim 1 : vector<8x256xf32>, i32 -> vector<8x256xf32>
    %c6_64 = arith.constant 6 : index
    %c0_65 = arith.constant 0 : index
    %82 = vector.load %arg6[%c6_64, %c0_65] : memref<9x256xf32, #tpu.memory_space<vmem>>, vector<1x256xf32>
    %83 = vector.broadcast %82 : vector<1x256xf32> to vector<8x256xf32>
    %84 = arith.mulf %81, %83 : vector<8x256xf32>
    %c48_66 = arith.constant 48 : index
    %c0_67 = arith.constant 0 : index
    %85 = vector.load %arg8[%c48_66, %c0_67] : memref<72x256xf32, #tpu.memory_space<vmem>>, vector<8x256xf32>
    tpu.vector_store %arg8[%c48_66, %c0_67], %84 {strides = array<i32>} : memref<72x256xf32, #tpu.memory_space<vmem>>, vector<8x256xf32>,
    %c240_i32_68 = arith.constant 240 : i32
    %86 = tpu.dynamic_rotate %52 by %c240_i32_68 dim 1 : vector<8x256xf32>, i32 -> vector<8x256xf32>
    %c7_69 = arith.constant 7 : index
    %c0_70 = arith.constant 0 : index
    %87 = vector.load %arg6[%c7_69, %c0_70] : memref<9x256xf32, #tpu.memory_space<vmem>>, vector<1x256xf32>
    %88 = vector.broadcast %87 : vector<1x256xf32> to vector<8x256xf32>
    %89 = arith.mulf %86, %88 : vector<8x256xf32>
    %c56_71 = arith.constant 56 : index
    %c0_72 = arith.constant 0 : index
    %90 = vector.load %arg8[%c56_71, %c0_72] : memref<72x256xf32, #tpu.memory_space<vmem>>, vector<8x256xf32>
    tpu.vector_store %arg8[%c56_71, %c0_72], %89 {strides = array<i32>} : memref<72x256xf32, #tpu.memory_space<vmem>>, vector<8x256xf32>,
    %c239_i32_73 = arith.constant 239 : i32
    %91 = tpu.dynamic_rotate %52 by %c239_i32_73 dim 1 : vector<8x256xf32>, i32 -> vector<8x256xf32>
    %c8_74 = arith.constant 8 : index
    %c0_75 = arith.constant 0 : index
    %92 = vector.load %arg6[%c8_74, %c0_75] : memref<9x256xf32, #tpu.memory_space<vmem>>, vector<1x256xf32>
    %93 = vector.broadcast %92 : vector<1x256xf32> to vector<8x256xf32>
    %94 = arith.mulf %91, %93 : vector<8x256xf32>
    %c64_76 = arith.constant 64 : index
    %c0_77 = arith.constant 0 : index
    %95 = vector.load %arg8[%c64_76, %c0_77] : memref<72x256xf32, #tpu.memory_space<vmem>>, vector<8x256xf32>
    tpu.vector_store %arg8[%c64_76, %c0_77], %94 {strides = array<i32>} : memref<72x256xf32, #tpu.memory_space<vmem>>, vector<8x256xf32>,
    %c0_78 = arith.constant 0 : index
    %c0_79 = arith.constant 0 : index
    %96 = vector.load %arg8[%c0_78, %c0_79] : memref<72x256xf32, #tpu.memory_space<vmem>>, vector<72x256xf32>
    %cst_80 = arith.constant dense<0.000000e+00> : vector<8x256xf32>
    %97 = tpu.matmul %53, %96, %cst_80 {dimension_numbers = #tpu.dot_dimension_numbers<[1], [0], [0], [1], [0, 0, 1, 1], [], []>} : vector<8x72xf32>, vector<72x256xf32>, vector<8x256xf32> -> vector<8x256xf32>
    %98 = vector.broadcast %54 : vector<8x1xf32> to vector<8x256xf32>
    %99 = arith.addf %97, %98 : vector<8x256xf32>
    %cst_81 = arith.constant 0.000000e+00 : f32
    %100 = vector.broadcast %cst_81 : f32 to vector<8x256xf32>
    %101 = arith.maximumf %99, %100 : vector<8x256xf32>
    %c0_82 = arith.constant 0 : index
    %c0_83 = arith.constant 0 : index
    %c0_84 = arith.constant 0 : index
    %102 = vector.load %arg7[%c0_82, %c0_83, %c0_84] : memref<1x8x256xf32, #tpu.memory_space<vmem>>, vector<1x8x256xf32>
    %103 = vector.shape_cast %102 : vector<1x8x256xf32> to vector<8x256xf32>
    %104 = vector.shape_cast %101 : vector<8x256xf32> to vector<1x8x256xf32>
    tpu.vector_store %arg7[%c0_82, %c0_83, %c0_84], %104 {strides = array<i32>} : memref<1x8x256xf32, #tpu.memory_space<vmem>>, vector<1x8x256xf32>,
    return
  }
  func.func @transform_0(%arg0: i32) -> (i32, i32, i32) {
    %c0_i32 = arith.constant 0 : i32
    %c0_i32_0 = arith.constant 0 : i32
    %c0_i32_1 = arith.constant 0 : i32
    return %arg0, %c0_i32, %c0_i32_0 : i32, i32, i32
  }
  func.func @transform_1(%arg0: i32) -> (i32, i32) {
    %c0_i32 = arith.constant 0 : i32
    %c0_i32_0 = arith.constant 0 : i32
    %c0_i32_1 = arith.constant 0 : i32
    return %c0_i32, %c0_i32_0 : i32, i32
  }
  func.func @transform_2(%arg0: i32) -> (i32, i32) {
    %c0_i32 = arith.constant 0 : i32
    %c0_i32_0 = arith.constant 0 : i32
    %c0_i32_1 = arith.constant 0 : i32
    return %c0_i32, %c0_i32_0 : i32, i32
  }
  func.func @transform_3(%arg0: i32) -> (i32, i32) {
    %c0_i32 = arith.constant 0 : i32
    %c0_i32_0 = arith.constant 0 : i32
    %c0_i32_1 = arith.constant 0 : i32
    return %c0_i32, %c0_i32_0 : i32, i32
  }
  func.func @transform_4(%arg0: i32) -> (i32, i32) {
    %c0_i32 = arith.constant 0 : i32
    %c0_i32_0 = arith.constant 0 : i32
    %c0_i32_1 = arith.constant 0 : i32
    return %c0_i32, %c0_i32_0 : i32, i32
  }
  func.func @transform_5(%arg0: i32) -> (i32, i32) {
    %c0_i32 = arith.constant 0 : i32
    %c0_i32_0 = arith.constant 0 : i32
    %c0_i32_1 = arith.constant 0 : i32
    return %c0_i32, %c0_i32_0 : i32, i32
  }
  func.func @transform_6(%arg0: i32) -> (i32, i32, i32) {
    %c0_i32 = arith.constant 0 : i32
    %c0_i32_0 = arith.constant 0 : i32
    %c0_i32_1 = arith.constant 0 : i32
    return %arg0, %c0_i32, %c0_i32_0 : i32, i32, i32
  }
}

</mosaic_0001>

<llo_original>
// kernel: tpu_custom_call.1
$region0: #{tpu_custom_call.1}
  #allocation0 [shape = 'u32[]', space=smem, size = 0x4, offset = 0x4, fixed_abs, tag = 'smem constant byte address 0x4 - core index']
  #allocation1 [shape = 'u32[72,128]{1,0:T(1,128)}', space=vmem, size = 0x9000, scoped, tag = 'internal scratch']
  #allocation2 [shape = 'f32[72,256]{1,0:T(8,128)}', space=vmem, size = 0x12000, scoped, tag = 'scratch operand']
  %s0 = inlined_call_operand.vmem [shape: f32[2,4,256], index: 0, kind: input, shape index: {}]
  %s1 = inlined_call_operand.hbm [shape: f32[8,72], index: 1, kind: input, shape index: {}]
  %s2 = inlined_call_operand.vmem [shape: f32[8,1], index: 2, kind: input, shape index: {}]
  %s3 = inlined_call_operand.hbm [shape: f32[8,72], index: 3, kind: input, shape index: {}]
  %s4 = inlined_call_operand.vmem [shape: f32[8,1], index: 4, kind: input, shape index: {}]
  %s5 = inlined_call_operand.hbm [shape: f32[9,256], index: 5, kind: input, shape index: {}]
  %s6 = inlined_call_operand.hbm [shape: f32[2,8,256], index: 6, kind: output, shape index: {}]
  %s7 = sld [smem:[#allocation0]]
  $region69: #{tpu_custom_call.1} parent=0
    _
  %s9 = ssub.s32 1, %s7
  %s10 = scalar_select 0, %s9, %s7
  $region1: #{tpu_custom_call.1} parent=0
    #allocation3 [shape = 'u8[4096]{0}', space=vmem, size = 0x1000, scoped, tag = 'input window, operand 1, single buffered']
    #allocation4 [shape = 's32[2]{0}', space=sflag, size = 0x8, scoped, tag = 'scoped memory for tpu_custom_call.1']
    #allocation5 [shape = 's32[2]{0}', space=sflag, size = 0x8, scoped, tag = 'scoped memory for tpu_custom_call.1']
    #allocation6 [shape = 'u8[4096]{0}', space=vmem, size = 0x1000, scoped, tag = 'input window, operand 3, single buffered']
    #allocation7 [shape = 's32[1]{0}', space=sflag, size = 0x4, scoped, tag = 'scoped memory for tpu_custom_call.1']
    #allocation8 [shape = 'u8[16384]{0}', space=vmem, size = 0x4000, scoped, tag = 'input window, operand 5, single buffered']
    #allocation9 [shape = 'u8[16384]{0}', space=vmem, size = 0x4000, scoped, tag = 'output window, operand 0']
    %11 = vsyncpa [#allocation4], 0
    %12 = vsyncpa [#allocation7], 0
    %13 = vsyncpa [#allocation5], 0
    %s14 = scalar_lea.sflag [#allocation5], 1
    %15 = vsyncpa %s14, 0
    loop: start=0, step=1, limit=4
    $region2: #{tpu_custom_call.1} parent=1 // loop_pre_header
      _
    $region3: #{tpu_custom_call.1} parent=1 // loop_header
      %s17 = sphi 0, %s21
      %p18 = scmp.ge.s32.totalorder %s17, 4
      %s27 = sphi 0, %s29
      %s30 = sphi 0, %s27
      %s31 = sphi 0, %s30
      %s47 = sphi 0, %s31
      %s51 = sphi 0, %s51
      %s53 = sphi 0, %s51
      %s54 = sphi 0, %s53
      %s68 = sphi 0, %s54
      %s72 = sphi 0, %s72
      %s74 = sphi 0, %s72
      %s75 = sphi 0, %s74
      %s89 = sphi 0, %s75
      %s93 = sphi 0, %s93
      %s95 = sphi 0, %s93
      %s96 = sphi 0, %s95
      %s110 = sphi 0, %s96
      %s114 = sphi 0, %s114
      %s116 = sphi 0, %s114
      %s117 = sphi 0, %s116
      %s131 = sphi 0, %s117
      %s135 = sphi 0, %s135
      %s137 = sphi 0, %s135
      %s138 = sphi 0, %s137
      %s152 = sphi 0, %s138
      %s158 = sphi 0, %s160
      %s161 = sphi 0, %s158
      %s162 = sphi 0, %s161
      %s178 = sphi 0, %s162
    $region4: #{tpu_custom_call.1} parent=1 // loop_header_branch
      %20 = sbr.rel (%p18) target = $region8
    $region5: #{tpu_custom_call.1} parent=1 // loop_body
      %s22 = ssub.s32 %s17, 1
      %s23 = ssub.s32 %s17, 2
      %s24 = sadd.s32 %s17, 1
      %s25 = ssub.s32 %s17, %s24
      %p26 = scmp.eq.s32.totalorder %s25, 0
      %s28 = sadd.s32 %s27, 1
      %s29 = scalar_select %p26, %s27, %s28
      %p32 = pneg %p26
      %p33 = scmp.eq.s32.totalorder %s17, 1
      %p34 = por %p32, %p33
      %p35 = scmp.ne.s32.totalorder %s27, %s30
      %p36 = scmp.eq.s32.totalorder %s17, 0
      %p37 = por %p35, %p36
      %p38 = scmp.ne.s32.totalorder %s27, %s30
      %p39 = scmp.eq.s32.totalorder %s22, 1
      %p40 = por %p38, %p39
      %p41 = scmp.ne.s32.totalorder %s30, %s31
      %p42 = scmp.eq.s32.totalorder %s22, 0
      %p43 = por %p41, %p42
      %p44 = scmp.ne.s32.totalorder %s30, %s31
      %p45 = scmp.eq.s32.totalorder %s23, 1
      %p46 = por %p44, %p45
      %p48 = scmp.ne.s32.totalorder %s31, %s47
      %p49 = scmp.eq.s32.totalorder %s23, 0
      %p50 = por %p48, %p49
      %s52 = sadd.s32 %s51, 1
      %p55 = scmp.eq.s32.totalorder %s17, 1
      %p56 = scmp.ne.s32.totalorder %s51, %s53
      %p57 = scmp.eq.s32.totalorder %s17, 0
      %p58 = por %p56, %p57
      %p59 = scmp.ne.s32.totalorder %s51, %s53
      %p60 = scmp.eq.s32.totalorder %s22, 1
      %p61 = por %p59, %p60
      %p62 = scmp.ne.s32.totalorder %s53, %s54
      %p63 = scmp.eq.s32.totalorder %s22, 0
      %p64 = por %p62, %p63
      %p65 = scmp.ne.s32.totalorder %s53, %s54
      %p66 = scmp.eq.s32.totalorder %s23, 1
      %p67 = por %p65, %p66
      %p69 = scmp.ne.s32.totalorder %s54, %s68
      %p70 = scmp.eq.s32.totalorder %s23, 0
      %p71 = por %p69, %p70
      %s73 = sadd.s32 %s72, 1
      %p76 = scmp.eq.s32.totalorder %s17, 1
      %p77 = scmp.ne.s32.totalorder %s72, %s74
      %p78 = scmp.eq.s32.totalorder %s17, 0
      %p79 = por %p77, %p78
      %p80 = scmp.ne.s32.totalorder %s72, %s74
      %p81 = scmp.eq.s32.totalorder %s22, 1
      %p82 = por %p80, %p81
      %p83 = scmp.ne.s32.totalorder %s74, %s75
      %p84 = scmp.eq.s32.totalorder %s22, 0
      %p85 = por %p83, %p84
      %p86 = scmp.ne.s32.totalorder %s74, %s75
      %p87 = scmp.eq.s32.totalorder %s23, 1
      %p88 = por %p86, %p87
      %p90 = scmp.ne.s32.totalorder %s75, %s89
      %p91 = scmp.eq.s32.totalorder %s23, 0
      %p92 = por %p90, %p91
      %s94 = sadd.s32 %s93, 1
      %p97 = scmp.eq.s32.totalorder %s17, 1
      %p98 = scmp.ne.s32.totalorder %s93, %s95
      %p99 = scmp.eq.s32.totalorder %s17, 0
      %p100 = por %p98, %p99
      %p101 = scmp.ne.s32.totalorder %s93, %s95
      %p102 = scmp.eq.s32.totalorder %s22, 1
      %p103 = por %p101, %p102
      %p104 = scmp.ne.s32.totalorder %s95, %s96
      %p105 = scmp.eq.s32.totalorder %s22, 0
      %p106 = por %p104, %p105
      %p107 = scmp.ne.s32.totalorder %s95, %s96
      %p108 = scmp.eq.s32.totalorder %s23, 1
      %p109 = por %p107, %p108
      %p111 = scmp.ne.s32.totalorder %s96, %s110
      %p112 = scmp.eq.s32.totalorder %s23, 0
      %p113 = por %p111, %p112
      %s115 = sadd.s32 %s114, 1
      %p118 = scmp.eq.s32.totalorder %s17, 1
      %p119 = scmp.ne.s32.totalorder %s114, %s116
      %p120 = scmp.eq.s32.totalorder %s17, 0
      %p121 = por %p119, %p120
      %p122 = scmp.ne.s32.totalorder %s114, %s116
      %p123 = scmp.eq.s32.totalorder %s22, 1
      %p124 = por %p122, %p123
      %p125 = scmp.ne.s32.totalorder %s116, %s117
      %p126 = scmp.eq.s32.totalorder %s22, 0
      %p127 = por %p125, %p126
      %p128 = scmp.ne.s32.totalorder %s116, %s117
      %p129 = scmp.eq.s32.totalorder %s23, 1
      %p130 = por %p128, %p129
      %p132 = scmp.ne.s32.totalorder %s117, %s131
      %p133 = scmp.eq.s32.totalorder %s23, 0
      %p134 = por %p132, %p133
      %s136 = sadd.s32 %s135, 1
      %p139 = scmp.eq.s32.totalorder %s17, 1
      %p140 = scmp.ne.s32.totalorder %s135, %s137
      %p141 = scmp.eq.s32.totalorder %s17, 0
      %p142 = por %p140, %p141
      %p143 = scmp.ne.s32.totalorder %s135, %s137
      %p144 = scmp.eq.s32.totalorder %s22, 1
      %p145 = por %p143, %p144
      %p146 = scmp.ne.s32.totalorder %s137, %s138
      %p147 = scmp.eq.s32.totalorder %s22, 0
      %p148 = por %p146, %p147
      %p149 = scmp.ne.s32.totalorder %s137, %s138
      %p150 = scmp.eq.s32.totalorder %s23, 1
      %p151 = por %p149, %p150
      %p153 = scmp.ne.s32.totalorder %s138, %s152
      %p154 = scmp.eq.s32.totalorder %s23, 0
      %p155 = por %p153, %p154
      %s156 = ssub.s32 %s17, %s24
      %p157 = scmp.eq.s32.totalorder %s156, 0
      %s159 = sadd.s32 %s158, 1
      %s160 = scalar_select %p157, %s158, %s159
      %p163 = pneg %p157
      %p164 = scmp.eq.s32.totalorder %s17, 1
      %p165 = por %p163, %p164
      %p166 = scmp.ne.s32.totalorder %s158, %s161
      %p167 = scmp.eq.s32.totalorder %s17, 0
      %p168 = por %p166, %p167
      %p169 = scmp.ne.s32.totalorder %s158, %s161
      %p170 = scmp.eq.s32.totalorder %s22, 1
      %p171 = por %p169, %p170
      %p172 = scmp.ne.s32.totalorder %s161, %s162
      %p173 = scmp.eq.s32.totalorder %s22, 0
      %p174 = por %p172, %p173
      %p175 = scmp.ne.s32.totalorder %s161, %s162
      %p176 = scmp.eq.s32.totalorder %s23, 1
      %p177 = por %p175, %p176
      %p179 = scmp.ne.s32.totalorder %s162, %s178
      %p180 = scmp.eq.s32.totalorder %s23, 0
      %p181 = por %p179, %p180
      %p182 = scmp.le.s32.totalorder 1, %s17
      %p183 = scmp.lt.s32.totalorder %s17, 3
      %p184 = pnand %p182, %p183
      %p185 = pneg %p184
      // Predicated region
      $region9: #{tpu_custom_call.1} parent=5 // pred_check
        _
      $region10: #{tpu_custom_call.1} parent=5 // pred_check_branch
        %187 = sbr.rel (%p184) target = $region12
      $region11: #{tpu_custom_call.1} parent=5 // pred_region
        %s188 = ssub.s32 %s17, 1
        // Predicated region
        $region13: #{tpu_custom_call.1} parent=11 // pred_check
          %p189 = pneg %p64
        $region14: #{tpu_custom_call.1} parent=11 // pred_check_branch
          %191 = sbr.rel (%p189) target = $region16
        $region15: #{tpu_custom_call.1} parent=11 // pred_region
          %193 = vsyncadd [#allocation4], 0
          %s195 = sshll.u32 %s1, 4
          %s196 = int_to_ptr.hbm [resolvable:$true] %s195
          %s197 = sshll.u32 [#allocation3], 4
          %s198 = int_to_ptr.vmem [resolvable:$true] %s197
          %200 = dma.hbm_to_vmem [thread:$0]  %s196, 128, %s198, [#allocation4]
        $region16: #{tpu_custom_call.1} parent=11 // pred_fallthru
          _
        // Predicated region
        $region17: #{tpu_custom_call.1} parent=11 // pred_check
          %p201 = pneg %p85
        $region18: #{tpu_custom_call.1} parent=11 // pred_check_branch
          %203 = sbr.rel (%p201) target = $region20
        $region19: #{tpu_custom_call.1} parent=11 // pred_region
          _
        $region20: #{tpu_custom_call.1} parent=11 // pred_fallthru
          _
        // Predicated region
        $region21: #{tpu_custom_call.1} parent=11 // pred_check
          %p204 = pneg %p106
        $region22: #{tpu_custom_call.1} parent=11 // pred_check_branch
          %206 = sbr.rel (%p204) target = $region24
        $region23: #{tpu_custom_call.1} parent=11 // pred_region
          %208 = vsyncadd [#allocation7], 0
          %s210 = sshll.u32 %s3, 4
          %s211 = int_to_ptr.hbm [resolvable:$true] %s210
          %s212 = sshll.u32 [#allocation6], 4
          %s213 = int_to_ptr.vmem [resolvable:$true] %s212
          %215 = dma.hbm_to_vmem [thread:$0]  %s211, 128, %s213, [#allocation7]
        $region24: #{tpu_custom_call.1} parent=11 // pred_fallthru
          _
        // Predicated region
        $region25: #{tpu_custom_call.1} parent=11 // pred_check
          %p216 = pneg %p127
        $region26: #{tpu_custom_call.1} parent=11 // pred_check_branch
          %218 = sbr.rel (%p216) target = $region28
        $region27: #{tpu_custom_call.1} parent=11 // pred_region
          _
        $region28: #{tpu_custom_call.1} parent=11 // pred_fallthru
          _
        // Predicated region
        $region29: #{tpu_custom_call.1} parent=11 // pred_check
          %p219 = pneg %p148
        $region30: #{tpu_custom_call.1} parent=11 // pred_check_branch
          %221 = sbr.rel (%p219) target = $region32
        $region31: #{tpu_custom_call.1} parent=11 // pred_region
          %223 = vsyncadd [#allocation7], 0
          %s224 = sshll.u32 %s5, 4
          %s225 = int_to_ptr.hbm [resolvable:$true] %s224
          %s226 = sshll.u32 [#allocation8], 4
          %s227 = int_to_ptr.vmem [resolvable:$true] %s226
          %232 = dma.hbm_to_vmem [thread:$0]  %s225, 512, %s227, [#allocation7], 256, 256, 16
        $region32: #{tpu_custom_call.1} parent=11 // pred_fallthru
          _
      $region12: #{tpu_custom_call.1} parent=5 // pred_fallthru
        _
      %p233 = scmp.lt.s32.totalorder %s17, 2
      // Predicated region
      $region33: #{tpu_custom_call.1} parent=5 // pred_check
        %p234 = pneg %p233
      $region34: #{tpu_custom_call.1} parent=5 // pred_check_branch
        %236 = sbr.rel (%p234) target = $region36
      $region35: #{tpu_custom_call.1} parent=5 // pred_region
        // Predicated region
        $region37: #{tpu_custom_call.1} parent=35 // pred_check
          %p237 = pneg %p37
        $region38: #{tpu_custom_call.1} parent=35 // pred_check_branch
          %239 = sbr.rel (%p237) target = $region40
        $region39: #{tpu_custom_call.1} parent=35 // pred_region
          %p240 = scmp.lt.s32.totalorder %s17, 1
          %s241 = scalar_select %p240, %s17, 1
          %s242 = smul.addr %s241, 2
          %s243 = smul.addr %s242, 4
          %s244 = scalar_lea.vmem %s0, %s243
        $region40: #{tpu_custom_call.1} parent=35 // pred_fallthru
          _
      $region36: #{tpu_custom_call.1} parent=5 // pred_fallthru
        _
      %p245 = scmp.le.s32.totalorder 1, %s17
      %p246 = scmp.lt.s32.totalorder %s17, 3
      %p247 = pnand %p245, %p246
      %p248 = pneg %p247
      // Predicated region
      $region41: #{tpu_custom_call.1} parent=5 // pred_check
        _
      $region42: #{tpu_custom_call.1} parent=5 // pred_check_branch
        %250 = sbr.rel (%p247) target = $region44
      $region43: #{tpu_custom_call.1} parent=5 // pred_region
        %s251 = ssub.s32 %s17, 1
        // Predicated region
        $region45: #{tpu_custom_call.1} parent=43 // pred_check
          %p252 = pneg %p64
        $region46: #{tpu_custom_call.1} parent=43 // pred_check_branch
          %254 = sbr.rel (%p252) target = $region48
        $region47: #{tpu_custom_call.1} parent=43 // pred_region
          %256 = dma.done [#allocation4], 128
        $region48: #{tpu_custom_call.1} parent=43 // pred_fallthru
          _
        // Predicated region
        $region49: #{tpu_custom_call.1} parent=43 // pred_check
          %p257 = pneg %p106
        $region50: #{tpu_custom_call.1} parent=43 // pred_check_branch
          %259 = sbr.rel (%p257) target = $region52
        $region51: #{tpu_custom_call.1} parent=43 // pred_region
          %261 = dma.done [#allocation7], 128
        $region52: #{tpu_custom_call.1} parent=43 // pred_fallthru
          _
        // Predicated region
        $region53: #{tpu_custom_call.1} parent=43 // pred_check
          %p262 = pneg %p148
        $region54: #{tpu_custom_call.1} parent=43 // pred_check_branch
          %264 = sbr.rel (%p262) target = $region56
        $region55: #{tpu_custom_call.1} parent=43 // pred_region
          %266 = dma.done [#allocation7], 512
        $region56: #{tpu_custom_call.1} parent=43 // pred_fallthru
          _
        %p267 = scmp.lt.s32.totalorder %s22, 1
        %s268 = scalar_select %p267, %s22, 1
        %s269 = smul.addr %s268, 2
        %s270 = smul.addr %s269, 4
        %s271 = scalar_lea.vmem %s0, %s270
        %p272 = pneg %p43
        %p273 = pneg %p40
        %p274 = pneg %p64
        %p275 = pneg %p61
        %p276 = pneg %p85
        %p277 = pneg %p82
        %p278 = pneg %p106
        %p279 = pneg %p103
        %p280 = pneg %p127
        %p281 = pneg %p124
        %p282 = pneg %p148
        %p283 = pneg %p145
        %p284 = pneg %p174
        %p285 = pneg %p171
        %s286 = sand.u32 %s161, 1
        %s287 = scalar_lea.sflag [#allocation5], %s286
        %s288 = sand.u32 %s161, 1
        %s289 = smul.addr %s288, 16
        %s290 = scalar_lea.vmem [#allocation9], %s289
        %p291 = scmp.lt.s32.totalorder %s22, 1
        %s292 = scalar_select %p291, %s22, 1
        %s293 = smul.addr %s292, 2
        %s294 = smul.addr %s293, 4
        %s295 = scalar_lea.vmem %s0, %s294
        %296 = vst [vmem:[#allocation2] sm:$0xff] 0.0
        %297 = vst [vmem:[#allocation2 + $0x8] sm:$0xff] 0.0
        %298 = vst [vmem:[#allocation2 + $0x10] sm:$0xff] 0.0
        %299 = vst [vmem:[#allocation2 + $0x18] sm:$0xff] 0.0
        %300 = vst [vmem:[#allocation2 + $0x20] sm:$0xff] 0.0
        %301 = vst [vmem:[#allocation2 + $0x28] sm:$0xff] 0.0
        %302 = vst [vmem:[#allocation2 + $0x30] sm:$0xff] 0.0
        %303 = vst [vmem:[#allocation2 + $0x38] sm:$0xff] 0.0
        %304 = vst [vmem:[#allocation2 + $0x40] sm:$0xff] 0.0
        %305 = vst [vmem:[#allocation2 + $0x48] sm:$0xff] 0.0
        %306 = vst [vmem:[#allocation2 + $0x50] sm:$0xff] 0.0
        %307 = vst [vmem:[#allocation2 + $0x58] sm:$0xff] 0.0
        %308 = vst [vmem:[#allocation2 + $0x60] sm:$0xff] 0.0
        %309 = vst [vmem:[#allocation2 + $0x68] sm:$0xff] 0.0
        %310 = vst [vmem:[#allocation2 + $0x70] sm:$0xff] 0.0
        %311 = vst [vmem:[#allocation2 + $0x78] sm:$0xff] 0.0
        %312 = vst [vmem:[#allocation2 + $0x80] sm:$0xff] 0.0
        %313 = vst [vmem:[#allocation2 + $0x88] sm:$0xff] 0.0
        %v314 = vld [vmem:[%s295] sm:$0xff]
        %v315 = vld [vmem:[#allocation3] sm:$0xff]
        %v316 = vld [vmem:[%s2] sm:$0xff]
        %318 = vst [vmem:[#allocation1] ss:$2 sm:$0xff] %v314
        %v319 = vld.sshfl [vmem:[#allocation1] sm:$0xff pattern:$0x75316420]
        %v320 = vld.sshfl [vmem:[#allocation1 + $0x8] sm:$0xff pattern:$0x75316420]
        %323 = vrot.lane.b32.xlu0 %v319, 17
        %v324 = vpop.permute.xlu0 %323
        %325 = vrot.lane.b32.xlu0 %v320, 17
        %v326 = vpop.permute.xlu0 %325
        %v327 = vlaneseq
        %v328 = vand.u32 %v327, 127
        %vm329 = vcmp.lt.s32.totalorder %v328, 17
        %v330 = vsel %vm329, %v324, %v326
        %v331 = vsel %vm329, %v326, %v324
        %v332 = vld [vmem:[#allocation8] ss:$8 sm:$0x3]
        %v334 = vperm.slane %v332, 0
        %v335 = vperm.slane %v332, 1
        %v338 = vmul.f32 %v331, %v334
        %v339 = vmul.f32 %v330, %v335
        %340 = vst [vmem:[#allocation2] sm:$0xf] %v338
        %341 = vst [vmem:[#allocation2 + $0x8] sm:$0xf] %v339
        %342 = vst [vmem:[#allocation1] ss:$2 sm:$0xff] %v314
        %v343 = vld.sshfl [vmem:[#allocation1] sm:$0xff pattern:$0x75316420]
        %v344 = vld.sshfl [vmem:[#allocation1 + $0x8] sm:$0xff pattern:$0x75316420]
        %347 = vrot.lane.b32.xlu0 %v343, 16
        %v348 = vpop.permute.xlu0 %347
        %349 = vrot.lane.b32.xlu0 %v344, 16
        %v350 = vpop.permute.xlu0 %349
        %vm351 = vcmp.lt.s32.totalorder %v328, 16
        %v352 = vsel %vm351, %v348, %v350
        %v353 = vsel %vm351, %v350, %v348
        %s354 = scalar_lea.vmem [#allocation8], 1
        %v355 = vld [vmem:[%s354] ss:$8 sm:$0x3]
        %v357 = vperm.slane %v355, 0
        %v358 = vperm.slane %v355, 1
        %v361 = vmul.f32 %v353, %v357
        %v362 = vmul.f32 %v352, %v358
        %363 = vst [vmem:[#allocation2 + $0x10] sm:$0xf] %v361
        %364 = vst [vmem:[#allocation2 + $0x18] sm:$0xf] %v362
        %365 = vst [vmem:[#allocation1] ss:$2 sm:$0xff] %v314
        %v366 = vld.sshfl [vmem:[#allocation1] sm:$0xff pattern:$0x75316420]
        %v367 = vld.sshfl [vmem:[#allocation1 + $0x8] sm:$0xff pattern:$0x75316420]
        %370 = vrot.lane.b32.xlu0 %v366, 15
        %v371 = vpop.permute.xlu0 %370
        %372 = vrot.lane.b32.xlu0 %v367, 15
        %v373 = vpop.permute.xlu0 %372
        %vm374 = vcmp.lt.s32.totalorder %v328, 15
        %v375 = vsel %vm374, %v371, %v373
        %v376 = vsel %vm374, %v373, %v371
        %s377 = scalar_lea.vmem [#allocation8], 2
        %v378 = vld [vmem:[%s377] ss:$8 sm:$0x3]
        %v380 = vperm.slane %v378, 0
        %v381 = vperm.slane %v378, 1
        %v384 = vmul.f32 %v376, %v380
        %v385 = vmul.f32 %v375, %v381
        %386 = vst [vmem:[#allocation2 + $0x20] sm:$0xf] %v384
        %387 = vst [vmem:[#allocation2 + $0x28] sm:$0xf] %v385
        %388 = vst [vmem:[#allocation1] ss:$2 sm:$0xff] %v314
        %v389 = vld.sshfl [vmem:[#allocation1] sm:$0xff pattern:$0x75316420]
        %v390 = vld.sshfl [vmem:[#allocation1 + $0x8] sm:$0xff pattern:$0x75316420]
        %393 = vrot.lane.b32.xlu0 %v389, 1
        %v394 = vpop.permute.xlu0 %393
        %395 = vrot.lane.b32.xlu0 %v390, 1
        %v396 = vpop.permute.xlu0 %395
        %vm397 = vcmp.lt.s32.totalorder %v328, 1
        %v398 = vsel %vm397, %v394, %v396
        %v399 = vsel %vm397, %v396, %v394
        %s400 = scalar_lea.vmem [#allocation8], 3
        %v401 = vld [vmem:[%s400] ss:$8 sm:$0x3]
        %v403 = vperm.slane %v401, 0
        %v404 = vperm.slane %v401, 1
        %v407 = vmul.f32 %v399, %v403
        %v408 = vmul.f32 %v398, %v404
        %409 = vst [vmem:[#allocation2 + $0x30] sm:$0xf] %v407
        %410 = vst [vmem:[#allocation2 + $0x38] sm:$0xf] %v408
        %411 = vst [vmem:[#allocation1] ss:$2 sm:$0xff] %v314
        %v412 = vld.sshfl [vmem:[#allocation1] sm:$0xff pattern:$0x75316420]
        %v413 = vld.sshfl [vmem:[#allocation1 + $0x8] sm:$0xff pattern:$0x75316420]
        %416 = vst [vmem:[#allocation2 + $0x40] sm:$0xf] %v412
        %417 = vst [vmem:[#allocation2 + $0x48] sm:$0xf] %v413
        %418 = vst [vmem:[#allocation1] ss:$2 sm:$0xff] %v314
        %v419 = vld.sshfl [vmem:[#allocation1] sm:$0xff pattern:$0x75316420]
        %v420 = vld.sshfl [vmem:[#allocation1 + $0x8] sm:$0xff pattern:$0x75316420]
        %423 = vrot.lane.b32.xlu0 %v419, 127
        %v424 = vpop.permute.xlu0 %423
        %425 = vrot.lane.b32.xlu0 %v420, 127
        %v426 = vpop.permute.xlu0 %425
        %vm427 = vcmp.lt.s32.totalorder %v328, 127
        %v428 = vsel %vm427, %v424, %v426
        %v429 = vsel %vm427, %v426, %v424
        %s430 = scalar_lea.vmem [#allocation8], 5
        %v431 = vld [vmem:[%s430] ss:$8 sm:$0x3]
        %v433 = vperm.slane %v431, 0
        %v434 = vperm.slane %v431, 1
        %v437 = vmul.f32 %v428, %v433
        %v438 = vmul.f32 %v429, %v434
        %439 = vst [vmem:[#allocation2 + $0x50] sm:$0xf] %v437
        %440 = vst [vmem:[#allocation2 + $0x58] sm:$0xf] %v438
        %441 = vst [vmem:[#allocation1] ss:$2 sm:$0xff] %v314
        %v442 = vld.sshfl [vmem:[#allocation1] sm:$0xff pattern:$0x75316420]
        %v443 = vld.sshfl [vmem:[#allocation1 + $0x8] sm:$0xff pattern:$0x75316420]
        %446 = vrot.lane.b32.xlu0 %v442, 113
        %v447 = vpop.permute.xlu0 %446
        %448 = vrot.lane.b32.xlu0 %v443, 113
        %v449 = vpop.permute.xlu0 %448
        %vm450 = vcmp.lt.s32.totalorder %v328, 113
        %v451 = vsel %vm450, %v447, %v449
        %v452 = vsel %vm450, %v449, %v447
        %s453 = scalar_lea.vmem [#allocation8], 6
        %v454 = vld [vmem:[%s453] ss:$8 sm:$0x3]
        %v456 = vperm.slane %v454, 0
        %v457 = vperm.slane %v454, 1
        %v460 = vmul.f32 %v451, %v456
        %v461 = vmul.f32 %v452, %v457
        %462 = vst [vmem:[#allocation2 + $0x60] sm:$0xf] %v460
        %463 = vst [vmem:[#allocation2 + $0x68] sm:$0xf] %v461
        %464 = vst [vmem:[#allocation1] ss:$2 sm:$0xff] %v314
        %v465 = vld.sshfl [vmem:[#allocation1] sm:$0xff pattern:$0x75316420]
        %v466 = vld.sshfl [vmem:[#allocation1 + $0x8] sm:$0xff pattern:$0x75316420]
        %469 = vrot.lane.b32.xlu0 %v465, 112
        %v470 = vpop.permute.xlu0 %469
        %471 = vrot.lane.b32.xlu0 %v466, 112
        %v472 = vpop.permute.xlu0 %471
        %vm473 = vcmp.lt.s32.totalorder %v328, 112
        %v474 = vsel %vm473, %v470, %v472
        %v475 = vsel %vm473, %v472, %v470
        %s476 = scalar_lea.vmem [#allocation8], 7
        %v477 = vld [vmem:[%s476] ss:$8 sm:$0x3]
        %v479 = vperm.slane %v477, 0
        %v480 = vperm.slane %v477, 1
        %v483 = vmul.f32 %v474, %v479
        %v484 = vmul.f32 %v475, %v480
        %485 = vst [vmem:[#allocation2 + $0x70] sm:$0xf] %v483
        %486 = vst [vmem:[#allocation2 + $0x78] sm:$0xf] %v484
        %487 = vst [vmem:[#allocation1] ss:$2 sm:$0xff] %v314
        %v488 = vld.sshfl [vmem:[#allocation1] sm:$0xff pattern:$0x75316420]
        %v489 = vld.sshfl [vmem:[#allocation1 + $0x8] sm:$0xff pattern:$0x75316420]
        %492 = vrot.lane.b32.xlu0 %v488, 111
        %v493 = vpop.permute.xlu0 %492
        %494 = vrot.lane.b32.xlu0 %v489, 111
        %v495 = vpop.permute.xlu0 %494
        %vm496 = vcmp.lt.s32.totalorder %v328, 111
        %v497 = vsel %vm496, %v493, %v495
        %v498 = vsel %vm496, %v495, %v493
        %s499 = scalar_lea.vmem [#allocation8], 16
        %v500 = vld [vmem:[%s499] ss:$8 sm:$0x3]
        %v502 = vperm.slane %v500, 0
        %v503 = vperm.slane %v500, 1
        %v506 = vmul.f32 %v497, %v502
        %v507 = vmul.f32 %v498, %v503
        %508 = vst [vmem:[#allocation2 + $0x80] sm:$0xf] %v506
        %509 = vst [vmem:[#allocation2 + $0x88] sm:$0xf] %v507
        %v510 = vld [vmem:[#allocation2] sm:$0xff]
        %v511 = vld [vmem:[#allocation2 + $0x8] sm:$0xff]
        %v512 = vld [vmem:[#allocation2 + $0x10] sm:$0xff]
        %v513 = vld [vmem:[#allocation2 + $0x18] sm:$0xff]
        %v514 = vld [vmem:[#allocation2 + $0x20] sm:$0xff]
        %v515 = vld [vmem:[#allocation2 + $0x28] sm:$0xff]
        %v516 = vld [vmem:[#allocation2 + $0x30] sm:$0xff]
        %v517 = vld [vmem:[#allocation2 + $0x38] sm:$0xff]
        %v518 = vld [vmem:[#allocation2 + $0x40] sm:$0xff]
        %v519 = vld [vmem:[#allocation2 + $0x48] sm:$0xff]
        %v520 = vld [vmem:[#allocation2 + $0x50] sm:$0xff]
        %v521 = vld [vmem:[#allocation2 + $0x58] sm:$0xff]
        %v522 = vld [vmem:[#allocation2 + $0x60] sm:$0xff]
        %v523 = vld [vmem:[#allocation2 + $0x68] sm:$0xff]
        %v524 = vld [vmem:[#allocation2 + $0x70] sm:$0xff]
        %v525 = vld [vmem:[#allocation2 + $0x78] sm:$0xff]
        %v526 = vld [vmem:[#allocation2 + $0x80] sm:$0xff]
        %v527 = vld [vmem:[#allocation2 + $0x88] sm:$0xff]
        %529 = vset.pattern.permute.xlu0 0
        %530 = vperm.xlu0 %529, %v316
        %v531 = vpop.permute.xlu0 %530
        %vm533 = vcmask 588800
        %v535 = vsel %vm533, %v315, 0
        %537 = vmatpush.msra.mxu0 0.0
        %538 = vmatpush.msra.mxu0 0.0
        %539 = vmatpush.msra.mxu0 0.0
        %540 = vmatpush.msra.mxu0 0.0
        %541 = vmatpush.msra.mxu0 0.0
        %542 = vmatpush.msra.mxu0 0.0
        %543 = vmatpush.msra.mxu0 0.0
        %544 = vmatpush.msra.mxu0 %v526
        %545 = vmatpush.msra.mxu0 %v524
        %546 = vmatpush.msra.mxu0 %v522
        %547 = vmatpush.msra.mxu0 %v520
        %548 = vmatpush.msra.mxu0 %v518
        %549 = vmatpush.msra.mxu0 %v516
        %550 = vmatpush.msra.mxu0 %v514
        %551 = vmatpush.msra.mxu0 %v512
        %552 = vmatpush.msra.mxu0 %v510
        %553 = vmatmul.f32.gmra.mxu0 %v535
        %v554 = vpop.f32.mrf.mxu0
        %v555 = vadd.f32 %v531, %v554
        %556 = vdwg.mxu0
        %557 = vmatpush.msra.mxu0 0.0
        %558 = vmatpush.msra.mxu0 0.0
        %559 = vmatpush.msra.mxu0 0.0
        %560 = vmatpush.msra.mxu0 0.0
        %561 = vmatpush.msra.mxu0 0.0
        %562 = vmatpush.msra.mxu0 0.0
        %563 = vmatpush.msra.mxu0 0.0
        %564 = vmatpush.msra.mxu0 %v527
        %565 = vmatpush.msra.mxu0 %v525
        %566 = vmatpush.msra.mxu0 %v523
        %567 = vmatpush.msra.mxu0 %v521
        %568 = vmatpush.msra.mxu0 %v519
        %569 = vmatpush.msra.mxu0 %v517
        %570 = vmatpush.msra.mxu0 %v515
        %571 = vmatpush.msra.mxu0 %v513
        %572 = vmatpush.msra.mxu0 %v511
        %573 = vmatmul.f32.gmra.mxu0 %v535
        %v574 = vpop.f32.mrf.mxu0
        %v575 = vadd.f32 %v531, %v574
        %576 = vdwg.mxu0
        %v577 = vmax.f32 %v555, 0.0
        %v578 = vmax.f32 %v575, 0.0
        %v579 = vld [vmem:[#allocation6] sm:$0xff]
        %v580 = vld [vmem:[%s4] sm:$0xff]
        %581 = vrot.lane.b32.xlu0 %v577, 17
        %v582 = vpop.permute.xlu0 %581
        %583 = vrot.lane.b32.xlu0 %v578, 17
        %v584 = vpop.permute.xlu0 %583
        %v585 = vsel %vm329, %v582, %v584
        %v586 = vsel %vm329, %v584, %v582
        %v587 = vld [vmem:[#allocation8] ss:$8 sm:$0x3]
        %v589 = vperm.slane %v587, 0
        %v590 = vperm.slane %v587, 1
        %v593 = vmul.f32 %v586, %v589
        %v594 = vmul.f32 %v585, %v590
        %595 = vst [vmem:[#allocation2] sm:$0xff] %v593
        %596 = vst [vmem:[#allocation2 + $0x8] sm:$0xff] %v594
        %597 = vrot.lane.b32.xlu0 %v577, 16
        %v598 = vpop.permute.xlu0 %597
        %599 = vrot.lane.b32.xlu0 %v578, 16
        %v600 = vpop.permute.xlu0 %599
        %v601 = vsel %vm351, %v598, %v600
        %v602 = vsel %vm351, %v600, %v598
        %v603 = vld [vmem:[%s354] ss:$8 sm:$0x3]
        %v605 = vperm.slane %v603, 0
        %v606 = vperm.slane %v603, 1
        %v609 = vmul.f32 %v602, %v605
        %v610 = vmul.f32 %v601, %v606
        %611 = vst [vmem:[#allocation2 + $0x10] sm:$0xff] %v609
        %612 = vst [vmem:[#allocation2 + $0x18] sm:$0xff] %v610
        %613 = vrot.lane.b32.xlu0 %v577, 15
        %v614 = vpop.permute.xlu0 %613
        %615 = vrot.lane.b32.xlu0 %v578, 15
        %v616 = vpop.permute.xlu0 %615
        %v617 = vsel %vm374, %v614, %v616
        %v618 = vsel %vm374, %v616, %v614
        %v619 = vld [vmem:[%s377] ss:$8 sm:$0x3]
        %v621 = vperm.slane %v619, 0
        %v622 = vperm.slane %v619, 1
        %v625 = vmul.f32 %v618, %v621
        %v626 = vmul.f32 %v617, %v622
        %627 = vst [vmem:[#allocation2 + $0x20] sm:$0xff] %v625
        %628 = vst [vmem:[#allocation2 + $0x28] sm:$0xff] %v626
        %629 = vrot.lane.b32.xlu0 %v577, 1
        %v630 = vpop.permute.xlu0 %629
        %631 = vrot.lane.b32.xlu0 %v578, 1
        %v632 = vpop.permute.xlu0 %631
        %v633 = vsel %vm397, %v630, %v632
        %v634 = vsel %vm397, %v632, %v630
        %v635 = vld [vmem:[%s400] ss:$8 sm:$0x3]
        %v637 = vperm.slane %v635, 0
        %v638 = vperm.slane %v635, 1
        %v641 = vmul.f32 %v634, %v637
        %v642 = vmul.f32 %v633, %v638
        %643 = vst [vmem:[#allocation2 + $0x30] sm:$0xff] %v641
        %644 = vst [vmem:[#allocation2 + $0x38] sm:$0xff] %v642
        %645 = vst [vmem:[#allocation2 + $0x40] sm:$0xff] %v577
        %646 = vst [vmem:[#allocation2 + $0x48] sm:$0xff] %v578
        %647 = vrot.lane.b32.xlu0 %v577, 127
        %v648 = vpop.permute.xlu0 %647
        %649 = vrot.lane.b32.xlu0 %v578, 127
        %v650 = vpop.permute.xlu0 %649
        %v651 = vsel %vm427, %v648, %v650
        %v652 = vsel %vm427, %v650, %v648
        %v653 = vld [vmem:[%s430] ss:$8 sm:$0x3]
        %v655 = vperm.slane %v653, 0
        %v656 = vperm.slane %v653, 1
        %v659 = vmul.f32 %v651, %v655
        %v660 = vmul.f32 %v652, %v656
        %661 = vst [vmem:[#allocation2 + $0x50] sm:$0xff] %v659
        %662 = vst [vmem:[#allocation2 + $0x58] sm:$0xff] %v660
        %663 = vrot.lane.b32.xlu0 %v577, 113
        %v664 = vpop.permute.xlu0 %663
        %665 = vrot.lane.b32.xlu0 %v578, 113
        %v666 = vpop.permute.xlu0 %665
        %v667 = vsel %vm450, %v664, %v666
        %v668 = vsel %vm450, %v666, %v664
        %v669 = vld [vmem:[%s453] ss:$8 sm:$0x3]
        %v671 = vperm.slane %v669, 0
        %v672 = vperm.slane %v669, 1
        %v675 = vmul.f32 %v667, %v671
        %v676 = vmul.f32 %v668, %v672
        %677 = vst [vmem:[#allocation2 + $0x60] sm:$0xff] %v675
        %678 = vst [vmem:[#allocation2 + $0x68] sm:$0xff] %v676
        %679 = vrot.lane.b32.xlu0 %v577, 112
        %v680 = vpop.permute.xlu0 %679
        %681 = vrot.lane.b32.xlu0 %v578, 112
        %v682 = vpop.permute.xlu0 %681
        %v683 = vsel %vm473, %v680, %v682
        %v684 = vsel %vm473, %v682, %v680
        %v685 = vld [vmem:[%s476] ss:$8 sm:$0x3]
        %v687 = vperm.slane %v685, 0
        %v688 = vperm.slane %v685, 1
        %v691 = vmul.f32 %v683, %v687
        %v692 = vmul.f32 %v684, %v688
        %693 = vst [vmem:[#allocation2 + $0x70] sm:$0xff] %v691
        %694 = vst [vmem:[#allocation2 + $0x78] sm:$0xff] %v692
        %695 = vrot.lane.b32.xlu0 %v577, 111
        %v696 = vpop.permute.xlu0 %695
        %697 = vrot.lane.b32.xlu0 %v578, 111
        %v698 = vpop.permute.xlu0 %697
        %v699 = vsel %vm496, %v696, %v698
        %v700 = vsel %vm496, %v698, %v696
        %v701 = vld [vmem:[%s499] ss:$8 sm:$0x3]
        %v703 = vperm.slane %v701, 0
        %v704 = vperm.slane %v701, 1
        %v707 = vmul.f32 %v699, %v703
        %v708 = vmul.f32 %v700, %v704
        %709 = vst [vmem:[#allocation2 + $0x80] sm:$0xff] %v707
        %710 = vst [vmem:[#allocation2 + $0x88] sm:$0xff] %v708
        %v711 = vld [vmem:[#allocation2] sm:$0xff]
        %v712 = vld [vmem:[#allocation2 + $0x8] sm:$0xff]
        %v713 = vld [vmem:[#allocation2 + $0x10] sm:$0xff]
        %v714 = vld [vmem:[#allocation2 + $0x18] sm:$0xff]
        %v715 = vld [vmem:[#allocation2 + $0x20] sm:$0xff]
        %v716 = vld [vmem:[#allocation2 + $0x28] sm:$0xff]
        %v717 = vld [vmem:[#allocation2 + $0x30] sm:$0xff]
        %v718 = vld [vmem:[#allocation2 + $0x38] sm:$0xff]
        %v719 = vld [vmem:[#allocation2 + $0x40] sm:$0xff]
        %v720 = vld [vmem:[#allocation2 + $0x48] sm:$0xff]
        %v721 = vld [vmem:[#allocation2 + $0x50] sm:$0xff]
        %v722 = vld [vmem:[#allocation2 + $0x58] sm:$0xff]
        %v723 = vld [vmem:[#allocation2 + $0x60] sm:$0xff]
        %v724 = vld [vmem:[#allocation2 + $0x68] sm:$0xff]
        %v725 = vld [vmem:[#allocation2 + $0x70] sm:$0xff]
        %v726 = vld [vmem:[#allocation2 + $0x78] sm:$0xff]
        %v727 = vld [vmem:[#allocation2 + $0x80] sm:$0xff]
        %v728 = vld [vmem:[#allocation2 + $0x88] sm:$0xff]
        %730 = vset.pattern.permute.xlu0 0
        %731 = vperm.xlu0 %730, %v580
        %v732 = vpop.permute.xlu0 %731
        %v735 = vsel %vm533, %v579, 0
        %737 = vmatpush.msra.mxu0 0.0
        %738 = vmatpush.msra.mxu0 0.0
        %739 = vmatpush.msra.mxu0 0.0
        %740 = vmatpush.msra.mxu0 0.0
        %741 = vmatpush.msra.mxu0 0.0
        %742 = vmatpush.msra.mxu0 0.0
        %743 = vmatpush.msra.mxu0 0.0
        %744 = vmatpush.msra.mxu0 %v727
        %745 = vmatpush.msra.mxu0 %v725
        %746 = vmatpush.msra.mxu0 %v723
        %747 = vmatpush.msra.mxu0 %v721
        %748 = vmatpush.msra.mxu0 %v719
        %749 = vmatpush.msra.mxu0 %v717
        %750 = vmatpush.msra.mxu0 %v715
        %751 = vmatpush.msra.mxu0 %v713
        %752 = vmatpush.msra.mxu0 %v711
        %753 = vmatmul.f32.gmra.mxu0 %v735
        %v754 = vpop.f32.mrf.mxu0
        %v755 = vadd.f32 %v732, %v754
        %756 = vdwg.mxu0
        %757 = vmatpush.msra.mxu0 0.0
        %758 = vmatpush.msra.mxu0 0.0
        %759 = vmatpush.msra.mxu0 0.0
        %760 = vmatpush.msra.mxu0 0.0
        %761 = vmatpush.msra.mxu0 0.0
        %762 = vmatpush.msra.mxu0 0.0
        %763 = vmatpush.msra.mxu0 0.0
        %764 = vmatpush.msra.mxu0 %v728
        %765 = vmatpush.msra.mxu0 %v726
        %766 = vmatpush.msra.mxu0 %v724
        %767 = vmatpush.msra.mxu0 %v722
        %768 = vmatpush.msra.mxu0 %v720
        %769 = vmatpush.msra.mxu0 %v718
        %770 = vmatpush.msra.mxu0 %v716
        %771 = vmatpush.msra.mxu0 %v714
        %772 = vmatpush.msra.mxu0 %v712
        %773 = vmatmul.f32.gmra.mxu0 %v735
        %v774 = vpop.f32.mrf.mxu0
        %v775 = vadd.f32 %v732, %v774
        %776 = vdwg.mxu0
        %v777 = vmax.f32 %v755, 0.0
        %v778 = vmax.f32 %v775, 0.0
        %779 = vst [vmem:[%s290] sm:$0xff] %v777
        %780 = vst [vmem:[%s290 + $0x8] sm:$0xff] %v778
        %s781 = sand.u32 %s161, 1
        %s782 = scalar_lea.sflag [#allocation5], %s781
        %s783 = sand.u32 %s161, 1
        %s784 = smul.addr %s783, 16
        %s785 = scalar_lea.vmem [#allocation9], %s784
        // Predicated region
        $region57: #{tpu_custom_call.1} parent=43 // pred_check
          %p786 = pneg %p171
        $region58: #{tpu_custom_call.1} parent=43 // pred_check_branch
          %788 = sbr.rel (%p786) target = $region60
        $region59: #{tpu_custom_call.1} parent=43 // pred_region
          %790 = vsyncadd %s782, 0
          %s791 = smul.addr %s22, 2
          %s792 = smul.addr %s791, 8
          %s793 = scalar_lea.hbm %s6, %s792
          %s795 = sshll.u32 %s785, 4
          %s796 = int_to_ptr.vmem [resolvable:$true] %s795
          %s797 = sshll.u32 %s793, 4
          %s798 = int_to_ptr.hbm [resolvable:$true] %s797
          %800 = dma.vmem_to_hbm [thread:$0]  %s796, 256, %s798, %s782
        $region60: #{tpu_custom_call.1} parent=43 // pred_fallthru
          _
      $region44: #{tpu_custom_call.1} parent=5 // pred_fallthru
        _
      %p801 = scmp.le.s32.totalorder 2, %s17
      // Predicated region
      $region61: #{tpu_custom_call.1} parent=5 // pred_check
        %p802 = pneg %p801
      $region62: #{tpu_custom_call.1} parent=5 // pred_check_branch
        %804 = sbr.rel (%p802) target = $region64
      $region63: #{tpu_custom_call.1} parent=5 // pred_region
        %s805 = ssub.s32 %s17, 2
        // Predicated region
        $region65: #{tpu_custom_call.1} parent=63 // pred_check
          %p806 = pneg %p177
        $region66: #{tpu_custom_call.1} parent=63 // pred_check_branch
          %808 = sbr.rel (%p806) target = $region68
        $region67: #{tpu_custom_call.1} parent=63 // pred_region
          %s809 = sand.u32 %s162, 1
          %s810 = scalar_lea.sflag [#allocation5], %s809
          %s811 = sand.u32 %s162, 1
          %s812 = smul.addr %s811, 16
          %s813 = scalar_lea.vmem [#allocation9], %s812
          %815 = dma.done %s810, 256
        $region68: #{tpu_custom_call.1} parent=63 // pred_fallthru
          _
      $region64: #{tpu_custom_call.1} parent=5 // pred_fallthru
        _
    $region6: #{tpu_custom_call.1} parent=1 // loop_footer
      %s21 = sadd.s32 1, %s17
    $region7: #{tpu_custom_call.1} parent=1 // loop_footer_branch
      %16 = sbr.rel target = $region3
    $region8: #{tpu_custom_call.1} parent=1 // loop_exit
      _
    %816 = vsyncpa [#allocation4], 1
    %s817 = scalar_lea.sflag [#allocation4], 1
    %818 = vsyncpa %s817, 1
    %819 = vsyncpa [#allocation7], 1
    %820 = vsyncpa [#allocation5], 1
    %s821 = scalar_lea.sflag [#allocation5], 1
    %822 = vsyncpa %s821, 1

</llo_original>
